<compile_context>
chip_gen: v7x
topology: tpu7x:2x2x1
jax: 0.10.0
libtpu: 0.0.40
codegen_flags: <defaults>
</compile_context>

<pallas_src>
import jax
import jax.numpy as jnp
from jax.experimental import pallas as pl
from jax.experimental.pallas import tpu as pltpu

_LANE = 128
_SUBLANE = 8
_NEG_BIG = -1e30  # mask value for padded K columns (exp underflows to 0)


def _round_up(a, b):
    return ((a + b - 1) // b) * b


def lfr_kernel(x_ref, ct_ref, c_ref, c2m_ref, map_ref, rec_ref):
    x = x_ref[...]                                                       # (T, D)

    # distances'[n,k] = c2[k] - 2 * sum_d alpha[d]*x[n,d]*c[k,d]
    # (the per-row sum_d alpha*x^2 term is dropped: softmax is row-shift
    #  invariant).  ct_ref already holds -2 * alpha[:,None] * centroids^T and
    #  c2m_ref holds the alpha-weighted centroid norms + pad-column bias.
    dist = jnp.dot(x, ct_ref[...], preferred_element_type=jnp.float32)   # (T, Kp)
    dist = dist + c2m_ref[...]

    # softmax over K (last axis); padded columns become exactly 0.
    m = dist - jnp.max(dist, axis=-1, keepdims=True)
    e = jnp.exp(m)
    inv = pl.reciprocal(jnp.sum(e, axis=-1, keepdims=True), approx=False)
    mapping = e * inv                                                     # (T, Kp)

    # Store only the useful leading K8 columns (K8 == map_ref last dim).
    map_ref[...] = mapping[:, : map_ref.shape[-1]]
    # Padded centroid rows are zero and padded mapping cols are zero -> exact.
    rec_ref[...] = jnp.dot(mapping, c_ref[...],
                           preferred_element_type=jnp.float32)            # (T, D)


def lfr_forward(x, is_protected, centroids, alpha_p, classif_w, *, tile_n=1024):
    """Pallas-backed LFR forward. Returns (mapping, reconstructed, pred)."""
    del is_protected  # does not influence the reference forward (see note above)

    x = jnp.asarray(x, jnp.float32)
    centroids = jnp.asarray(centroids, jnp.float32)
    alpha_p = jnp.asarray(alpha_p, jnp.float32)
    classif_w = jnp.asarray(classif_w, jnp.float32)

    n, d = x.shape
    k = centroids.shape[0]

    # Lane-dense K for the in-kernel softmax / matmuls; narrow K8 for the
    # HBM mapping output (block last dim == full array dim -> legal).
    k_pad = _round_up(k, _LANE)
    k8 = _round_up(k, _SUBLANE)

    # Sublane-aligned N tile; no padding of x, the grid handles the ragged
    # last block (rows are independent, partial-block writes are masked).
    tile_n = max(_SUBLANE, _round_up(min(tile_n, 1 << 20), _SUBLANE))
    tile = min(tile_n, _round_up(n, _SUBLANE))
    # Keep >=2 grid steps when possible so v7x's two TensorCores both get work.
    if pl.cdiv(n, tile) < 2 and n > 2 * _SUBLANE:
        tile = _round_up(pl.cdiv(n, 2), _SUBLANE)
    grid = (pl.cdiv(n, tile),)

    # Grid-invariant precompute (done once in the wrapper, not per tile).
    c_p = jnp.pad(centroids, ((0, k_pad - k), (0, 0)))              # (Kp, D), zero rows
    ct_scaled = (-2.0 * alpha_p[:, None]) * c_p.T                   # (D, Kp)
    c2 = jnp.sum(alpha_p[None, :] * c_p * c_p, axis=-1)             # (Kp,)
    pad_mask = jnp.where(jnp.arange(k_pad) < k, 0.0, _NEG_BIG).astype(jnp.float32)
    c2m = (c2 + pad_mask).reshape(1, k_pad)                         # (1, Kp)

    cost = pl.CostEstimate(
        flops=4 * n * d * k_pad,                  # two matmuls
        transcendentals=n * k_pad,                # softmax exp
        bytes_accessed=4 * (2 * n * d + n * k8 + 2 * k_pad * d + k_pad),
    )

    mapping_k8, reconstructed = pl.pallas_call(
        lfr_kernel,
        out_shape=(
            jax.ShapeDtypeStruct((n, k8), jnp.float32),   # mapping (K8 cols only)
            jax.ShapeDtypeStruct((n, d), jnp.float32),    # reconstructed
        ),
        grid=grid,
        in_specs=[
            pl.BlockSpec((tile, d), lambda i: (i, 0)),        # x row tile
            pl.BlockSpec((d, k_pad), lambda i: (0, 0)),       # -2*alpha*centroids^T
            pl.BlockSpec((k_pad, d), lambda i: (0, 0)),       # centroids (padded rows)
            pl.BlockSpec((1, k_pad), lambda i: (0, 0)),       # alpha-norms + pad mask
        ],
        out_specs=(
            pl.BlockSpec((tile, k8), lambda i: (i, 0)),
            pl.BlockSpec((tile, d), lambda i: (i, 0)),
        ),
        compiler_params=pltpu.CompilerParams(
            dimension_semantics=("parallel",),
        ),
        cost_estimate=cost,
    )(x, ct_scaled, c_p, c2m)

    mapping = mapping_k8[:, :k]
    # Width-1 output kept out of the kernel (lane-sparse store); trivial for XLA.
    pred = jnp.dot(mapping, jax.nn.sigmoid(classif_w)).reshape(-1)
    return mapping, reconstructed, pred


def lfr_reference(x, centroids, alpha_p, classif_w):
    """Pure-JAX reference matching the PyTorch forward exactly."""
    aux = (x[:, None, :] - centroids[None, :, :]) ** 2 * alpha_p[None, None, :]
    dist = aux.sum(-1)
    mapping = jax.nn.softmax(dist, axis=-1)
    reconstructed = mapping @ centroids
    pred = (mapping @ jax.nn.sigmoid(classif_w)).reshape(-1)
    return mapping, reconstructed, pred


def init_lfr_params(key, features_dim, k=5):
    """Deterministic parameter init mirroring LFR.init_weights shapes/dists."""
    k_ap, k_anp, k_w, k_c = jax.random.split(key, 4)
    alpha_p = jax.random.uniform(k_ap, (features_dim,), jnp.float32, 0.9, 1.1)
    alpha_np = jax.random.uniform(k_anp, (features_dim,), jnp.float32, 0.9, 1.1)
    classif_w = jax.random.normal(k_w, (k, 1), jnp.float32)
    centroids = jax.random.normal(k_c, (k, features_dim), jnp.float32)
    return alpha_p, alpha_np, classif_w, centroids


if __name__ == "__main__":
    features_dim = 32
    k = 5
    n = 8

    key = jax.random.PRNGKey(0)
    k_params, k_x, k_prot = jax.random.split(key, 3)

    alpha_p, alpha_np, classif_w, centroids = init_lfr_params(
        k_params, features_dim, k)
    x = jax.random.normal(k_x, (n, features_dim), jnp.float32)
    is_protected = jax.random.bernoulli(k_prot, 0.5, (n,))

    mapping, reconstructed, pred = lfr_forward(
        x, is_protected, centroids, alpha_p, classif_w)
    jax.block_until_ready((mapping, reconstructed, pred))

    assert mapping.shape == (n, k)
    assert reconstructed.shape == (n, features_dim)
    assert pred.shape == (n,)
    # softmax rows sum to 1
    assert bool(jnp.allclose(jnp.sum(mapping, axis=-1), 1.0, atol=1e-5))

    # Cross-check against the pure-JAX reference.
    map_ref, rec_ref, pred_ref = lfr_reference(x, centroids, alpha_p, classif_w)
    assert bool(jnp.allclose(mapping, map_ref, atol=1e-5, rtol=1e-5))
    assert bool(jnp.allclose(reconstructed, rec_ref, atol=1e-5, rtol=1e-5))
    assert bool(jnp.allclose(pred, pred_ref, atol=1e-5, rtol=1e-5))

    print("KERNEL_OK")
</pallas_src>

<mosaic_0001>
module attributes {stable_mosaic.version = 11 : i64} {
  func.func @lfr_kernel(%arg0: i32, %arg1: memref<8x32xf32, #tpu.memory_space<vmem>>, %arg2: memref<32x128xf32, #tpu.memory_space<vmem>>, %arg3: memref<128x32xf32, #tpu.memory_space<vmem>>, %arg4: memref<1x128xf32, #tpu.memory_space<vmem>>, %arg5: memref<8x8xf32, #tpu.memory_space<vmem>>, %arg6: memref<8x32xf32, #tpu.memory_space<vmem>>) attributes {dimension_semantics = [#tpu.dimension_semantics<parallel>], iteration_bounds = array<i64: 1>, scalar_prefetch = 0 : i64, scratch_operands = 0 : i64, tpu.core_type = #tpu.core_type<tc>, window_params = [{transform_indices = @transform_0, window_bounds = array<i64: 8, 32>}, {pipeline_mode = #tpu.pipeline_mode<synchronous>, transform_indices = @transform_1, window_bounds = array<i64: 32, 128>}, {pipeline_mode = #tpu.pipeline_mode<synchronous>, transform_indices = @transform_2, window_bounds = array<i64: 128, 32>}, {pipeline_mode = #tpu.pipeline_mode<synchronous>, transform_indices = @transform_3, window_bounds = array<i64: 1, 128>}, {transform_indices = @transform_4, window_bounds = array<i64: 8, 8>}, {transform_indices = @transform_5, window_bounds = array<i64: 8, 32>}]} {
    %c0 = arith.constant 0 : index
    %c0_0 = arith.constant 0 : index
    %0 = vector.load %arg1[%c0, %c0_0] : memref<8x32xf32, #tpu.memory_space<vmem>>, vector<8x32xf32>
    %c0_1 = arith.constant 0 : index
    %c0_2 = arith.constant 0 : index
    %1 = vector.load %arg2[%c0_1, %c0_2] : memref<32x128xf32, #tpu.memory_space<vmem>>, vector<32x128xf32>
    %cst = arith.constant dense<0.000000e+00> : vector<8x128xf32>
    %2 = tpu.matmul %0, %1, %cst {dimension_numbers = #tpu.dot_dimension_numbers<[1], [0], [0], [1], [0, 0, 1, 1], [], []>} : vector<8x32xf32>, vector<32x128xf32>, vector<8x128xf32> -> vector<8x128xf32>
    %c0_3 = arith.constant 0 : index
    %c0_4 = arith.constant 0 : index
    %3 = vector.load %arg4[%c0_3, %c0_4] : memref<1x128xf32, #tpu.memory_space<vmem>>, vector<1x128xf32>
    %4 = vector.broadcast %3 : vector<1x128xf32> to vector<8x128xf32>
    %5 = arith.addf %2, %4 : vector<8x128xf32>
    %cst_5 = arith.constant dense<0xFF800000> : vector<8xf32>
    %6 = vector.multi_reduction <maximumf>, %5, %cst_5 [1] : vector<8x128xf32> to vector<8xf32>
    %7 = vector.shape_cast %6 : vector<8xf32> to vector<8x1xf32>
    %8 = vector.broadcast %7 : vector<8x1xf32> to vector<8x128xf32>
    %9 = arith.subf %5, %8 : vector<8x128xf32>
    %10 = math.exp %9 : vector<8x128xf32>
    %cst_6 = arith.constant dense<0.000000e+00> : vector<8xf32>
    %11 = vector.multi_reduction <add>, %10, %cst_6 [1] : vector<8x128xf32> to vector<8xf32>
    %12 = vector.shape_cast %11 : vector<8xf32> to vector<8x1xf32>
    %13 = tpu.reciprocal %12 : vector<8x1xf32> -> vector<8x1xf32>
    %14 = vector.broadcast %13 : vector<8x1xf32> to vector<8x128xf32>
    %15 = arith.mulf %10, %14 : vector<8x128xf32>
    %16 = vector.extract_strided_slice %15 {offsets = [0, 0], sizes = [8, 8], strides = [1, 1]} : vector<8x128xf32> to vector<8x8xf32>
    %c0_7 = arith.constant 0 : index
    %c0_8 = arith.constant 0 : index
    %17 = vector.load %arg5[%c0_7, %c0_8] : memref<8x8xf32, #tpu.memory_space<vmem>>, vector<8x8xf32>
    tpu.vector_store %arg5[%c0_7, %c0_8], %16 {strides = array<i32>} : memref<8x8xf32, #tpu.memory_space<vmem>>, vector<8x8xf32>,
    %c0_9 = arith.constant 0 : index
    %c0_10 = arith.constant 0 : index
    %18 = vector.load %arg3[%c0_9, %c0_10] : memref<128x32xf32, #tpu.memory_space<vmem>>, vector<128x32xf32>
    %cst_11 = arith.constant dense<0.000000e+00> : vector<8x32xf32>
    %19 = tpu.matmul %15, %18, %cst_11 {dimension_numbers = #tpu.dot_dimension_numbers<[1], [0], [0], [1], [0, 0, 1, 1], [], []>} : vector<8x128xf32>, vector<128x32xf32>, vector<8x32xf32> -> vector<8x32xf32>
    %c0_12 = arith.constant 0 : index
    %c0_13 = arith.constant 0 : index
    %20 = vector.load %arg6[%c0_12, %c0_13] : memref<8x32xf32, #tpu.memory_space<vmem>>, vector<8x32xf32>
    tpu.vector_store %arg6[%c0_12, %c0_13], %19 {strides = array<i32>} : memref<8x32xf32, #tpu.memory_space<vmem>>, vector<8x32xf32>,
    return
  }
  func.func @transform_0(%arg0: i32) -> (i32, i32) {
    %c0_i32 = arith.constant 0 : i32
    %c0_i32_0 = arith.constant 0 : i32
    return %arg0, %c0_i32 : i32, i32
  }
  func.func @transform_1(%arg0: i32) -> (i32, i32) {
    %c0_i32 = arith.constant 0 : i32
    %c0_i32_0 = arith.constant 0 : i32
    %c0_i32_1 = arith.constant 0 : i32
    return %c0_i32, %c0_i32_0 : i32, i32
  }
  func.func @transform_2(%arg0: i32) -> (i32, i32) {
    %c0_i32 = arith.constant 0 : i32
    %c0_i32_0 = arith.constant 0 : i32
    %c0_i32_1 = arith.constant 0 : i32
    return %c0_i32, %c0_i32_0 : i32, i32
  }
  func.func @transform_3(%arg0: i32) -> (i32, i32) {
    %c0_i32 = arith.constant 0 : i32
    %c0_i32_0 = arith.constant 0 : i32
    %c0_i32_1 = arith.constant 0 : i32
    return %c0_i32, %c0_i32_0 : i32, i32
  }
  func.func @transform_4(%arg0: i32) -> (i32, i32) {
    %c0_i32 = arith.constant 0 : i32
    %c0_i32_0 = arith.constant 0 : i32
    return %arg0, %c0_i32 : i32, i32
  }
  func.func @transform_5(%arg0: i32) -> (i32, i32) {
    %c0_i32 = arith.constant 0 : i32
    %c0_i32_0 = arith.constant 0 : i32
    return %arg0, %c0_i32 : i32, i32
  }
}

</mosaic_0001>

<llo_original>
// kernel: tpu_custom_call.1
$region0: #{tpu_custom_call.1}
  #allocation0 [shape = 'u32[]', space=smem, size = 0x4, offset = 0x4, fixed_abs, tag = 'smem constant byte address 0x4 - core index']
  #allocation1 [shape = 'u32[144,128]{1,0:T(1,128)}', space=vmem, size = 0x12000, scoped, tag = 'internal scratch']
  %s0 = inlined_call_operand.vmem [shape: f32[8,32], index: 0, kind: input, shape index: {}]
  %s1 = inlined_call_operand.vmem [shape: f32[32,128], index: 1, kind: input, shape index: {}]
  %s2 = inlined_call_operand.vmem [shape: f32[128,32], index: 2, kind: input, shape index: {}]
  %s3 = inlined_call_operand.vmem [shape: f32[1,128], index: 3, kind: input, shape index: {}]
  %s4 = inlined_call_operand.hbm [shape: f32[8,8], index: 4, kind: output, shape index: {0}]
  %s5 = inlined_call_operand.hbm [shape: f32[8,32], index: 5, kind: output, shape index: {1}]
  %6 = xla_tuple %s4, %s5
  %s7 = sld [smem:[#allocation0]]
  $region34: #{tpu_custom_call.1} parent=0
    _
  %s9 = ssub.s32 1, %s7
  %s10 = scalar_select 0, %s9, %s7
  $region1: #{tpu_custom_call.1} parent=0
    #allocation2 [shape = 'u8[4096]{0}', space=vmem, size = 0x1000, scoped, tag = 'output window, operand 0, single buffered']
    #allocation3 [shape = 's32[1]{0}', space=sflag, size = 0x4, scoped, tag = 'scoped memory for tpu_custom_call.1']
    #allocation4 [shape = 'u8[4096]{0}', space=vmem, size = 0x1000, scoped, tag = 'output window, operand 1, single buffered']
    #allocation5 [shape = 's32[1]{0}', space=sflag, size = 0x4, scoped, tag = 'scoped memory for tpu_custom_call.1']
    %11 = vsyncpa [#allocation3], 0
    %12 = vsyncpa [#allocation5], 0
    // Predicated region
    $region2: #{tpu_custom_call.1} parent=1 // pred_check
      _
    $region3: #{tpu_custom_call.1} parent=1 // pred_check_branch
      %14 = sbr.rel (0) target = $region5
    $region4: #{tpu_custom_call.1} parent=1 // pred_region
      _
    $region5: #{tpu_custom_call.1} parent=1 // pred_fallthru
      _
    // Predicated region
    $region6: #{tpu_custom_call.1} parent=1 // pred_check
      _
    $region7: #{tpu_custom_call.1} parent=1 // pred_check_branch
      %16 = sbr.rel (0) target = $region9
    $region8: #{tpu_custom_call.1} parent=1 // pred_region
      _
    $region9: #{tpu_custom_call.1} parent=1 // pred_fallthru
      _
    // Predicated region
    $region10: #{tpu_custom_call.1} parent=1 // pred_check
      _
    $region11: #{tpu_custom_call.1} parent=1 // pred_check_branch
      %18 = sbr.rel (0) target = $region13
    $region12: #{tpu_custom_call.1} parent=1 // pred_region
      _
    $region13: #{tpu_custom_call.1} parent=1 // pred_fallthru
      _
    // Predicated region
    $region14: #{tpu_custom_call.1} parent=1 // pred_check
      _
    $region15: #{tpu_custom_call.1} parent=1 // pred_check_branch
      %20 = sbr.rel (0) target = $region17
    $region16: #{tpu_custom_call.1} parent=1 // pred_region
      _
    $region17: #{tpu_custom_call.1} parent=1 // pred_fallthru
      _
    %v21 = vld [vmem:[%s0] sm:$0xff]
    %v22 = vld [vmem:[%s1] sm:$0xff]
    %v23 = vld [vmem:[%s1 + $0x8] sm:$0xff]
    %v24 = vld [vmem:[%s1 + $0x10] sm:$0xff]
    %v25 = vld [vmem:[%s1 + $0x18] sm:$0xff]
    %v26 = vld [vmem:[%s3] sm:$0x1]
    %v28 = vlaneseq
    %v29 = vshrl.u32 %v28, 7
    %v30 = vsub.s32 0, %v29
    %v31 = vrot.slane %v26, %v30
    %vm33 = vcmask 261120
    %v35 = vsel %vm33, %v21, 0
    %37 = vmatprep.subr.mxu0 0.0
    %38 = vmatpush1.msra.mxu0 %v22
    %39 = vmatprep.subr.mxu0 0.0
    %40 = vmatpush1.msra.mxu0 %v23
    %41 = vmatprep.subr.mxu0 0.0
    %42 = vmatpush1.msra.mxu0 %v24
    %43 = vmatprep.subr.mxu0 0.0
    %44 = vmatpush1.msra.mxu0 %v25
    %45 = vmatprep.subr.mxu0 0.0
    %46 = vmatpush1.msra.mxu0 0.0
    %47 = vmatprep.subr.mxu0 0.0
    %48 = vmatpush1.msra.mxu0 0.0
    %49 = vmatprep.subr.mxu0 0.0
    %50 = vmatpush1.msra.mxu0 0.0
    %51 = vmatprep.subr.mxu0 0.0
    %52 = vmatpush1.msra.mxu0 0.0
    %53 = vmatprep.subr.mxu0 0.0
    %54 = vmatpush1.msra.mxu0 0.0
    %55 = vmatprep.subr.mxu0 0.0
    %56 = vmatpush1.msra.mxu0 0.0
    %57 = vmatprep.subr.mxu0 0.0
    %58 = vmatpush1.msra.mxu0 0.0
    %59 = vmatprep.subr.mxu0 0.0
    %60 = vmatpush1.msra.mxu0 0.0
    %61 = vmatprep.subr.mxu0 0.0
    %62 = vmatpush1.msra.mxu0 0.0
    %63 = vmatprep.subr.mxu0 0.0
    %64 = vmatpush1.msra.mxu0 0.0
    %65 = vmatprep.subr.mxu0 0.0
    %66 = vmatpush1.msra.mxu0 0.0
    %67 = vmatprep.subr.mxu0 0.0
    %68 = vmatpush1.msra.mxu0 0.0
    %69 = vmatprep.subr.mxu0 0.0
    %70 = vmatpush1.msra.mxu0 0.0
    %71 = vmatprep.subr.mxu0 0.0
    %72 = vmatpush1.msra.mxu0 0.0
    %73 = vmatprep.subr.mxu0 0.0
    %74 = vmatpush1.msra.mxu0 0.0
    %75 = vmatprep.subr.mxu0 0.0
    %76 = vmatpush1.msra.mxu0 0.0
    %77 = vmatprep.subr.mxu0 0.0
    %78 = vmatpush1.msra.mxu0 0.0
    %79 = vmatprep.subr.mxu0 0.0
    %80 = vmatpush1.msra.mxu0 0.0
    %81 = vmatprep.subr.mxu0 0.0
    %82 = vmatpush1.msra.mxu0 0.0
    %83 = vmatprep.subr.mxu0 0.0
    %84 = vmatpush1.msra.mxu0 0.0
    %85 = vmatprep.subr.mxu0 0.0
    %86 = vmatpush1.msra.mxu0 0.0
    %87 = vmatprep.subr.mxu0 0.0
    %88 = vmatpush1.msra.mxu0 0.0
    %89 = vmatprep.subr.mxu0 0.0
    %90 = vmatpush1.msra.mxu0 0.0
    %91 = vmatprep.subr.mxu0 0.0
    %92 = vmatpush1.msra.mxu0 0.0
    %93 = vmatprep.subr.mxu0 0.0
    %94 = vmatpush1.msra.mxu0 0.0
    %95 = vmatprep.subr.mxu0 0.0
    %96 = vmatpush1.msra.mxu0 0.0
    %97 = vmatprep.subr.mxu0 0.0
    %98 = vmatpush1.msra.mxu0 0.0
    %99 = vmatprep.subr.mxu0 0.0
    %100 = vmatpush1.msra.mxu0 0.0
    %101 = vmatprep.mubr.f32.mxu0 0.0
    %102 = vmatmul.mubr.f32.gmra.mrb[0].mxu0 %v35
    %v103 = vpop.f32.mrb[0].mxu0
    %v104 = vadd.f32 %v31, %v103
    %v105 = vpop.f32.mrb[0].mxu0
    %106 = vdwg.mxu0
    %107 = vmax.xlane.f32.xlu0 %v104
    %v108 = vpop.xlane.xlu0 %107
    %v109 = vsub.f32 %v104, %v108
    %v110 = vmul.f32 %v109, 1.442695
    %v111 = vpow.pop %v110
    %112 = vadd.xlane.f32.xlu0 %v111
    %v113 = vpop.xlane.xlu0 %112
    %v114 = vrcp.pop %v113
    %v115 = vmul.f32 %v111, %v114
    %vm116 = vcmask 64512
    %117 = vst.msk [vmem:[#allocation2] sm:$0xff] %vm116, %v115
    %v118 = vld [vmem:[%s2] sm:$0xff]
    %v119 = vld [vmem:[%s2 + $0x8] sm:$0xff]
    %v120 = vld [vmem:[%s2 + $0x10] sm:$0xff]
    %v121 = vld [vmem:[%s2 + $0x18] sm:$0xff]
    %v122 = vld [vmem:[%s2 + $0x20] sm:$0xff]
    %v123 = vld [vmem:[%s2 + $0x28] sm:$0xff]
    %v124 = vld [vmem:[%s2 + $0x30] sm:$0xff]
    %v125 = vld [vmem:[%s2 + $0x38] sm:$0xff]
    %v126 = vld [vmem:[%s2 + $0x40] sm:$0xff]
    %v127 = vld [vmem:[%s2 + $0x48] sm:$0xff]
    %v128 = vld [vmem:[%s2 + $0x50] sm:$0xff]
    %v129 = vld [vmem:[%s2 + $0x58] sm:$0xff]
    %v130 = vld [vmem:[%s2 + $0x60] sm:$0xff]
    %v131 = vld [vmem:[%s2 + $0x68] sm:$0xff]
    %v132 = vld [vmem:[%s2 + $0x70] sm:$0xff]
    %v133 = vld [vmem:[%s2 + $0x78] sm:$0xff]
    %134 = vmatprep.subr.mxu0 0.0
    %135 = vmatpush1.msra.mxu0 %v118
    %136 = vmatprep.subr.mxu0 0.0
    %137 = vmatpush1.msra.mxu0 %v119
    %138 = vmatprep.subr.mxu0 0.0
    %139 = vmatpush1.msra.mxu0 %v120
    %140 = vmatprep.subr.mxu0 0.0
    %141 = vmatpush1.msra.mxu0 %v121
    %142 = vmatprep.subr.mxu0 0.0
    %143 = vmatpush1.msra.mxu0 %v122
    %144 = vmatprep.subr.mxu0 0.0
    %145 = vmatpush1.msra.mxu0 %v123
    %146 = vmatprep.subr.mxu0 0.0
    %147 = vmatpush1.msra.mxu0 %v124
    %148 = vmatprep.subr.mxu0 0.0
    %149 = vmatpush1.msra.mxu0 %v125
    %150 = vmatprep.subr.mxu0 0.0
    %151 = vmatpush1.msra.mxu0 %v126
    %152 = vmatprep.subr.mxu0 0.0
    %153 = vmatpush1.msra.mxu0 %v127
    %154 = vmatprep.subr.mxu0 0.0
    %155 = vmatpush1.msra.mxu0 %v128
    %156 = vmatprep.subr.mxu0 0.0
    %157 = vmatpush1.msra.mxu0 %v129
    %158 = vmatprep.subr.mxu0 0.0
    %159 = vmatpush1.msra.mxu0 %v130
    %160 = vmatprep.subr.mxu0 0.0
    %161 = vmatpush1.msra.mxu0 %v131
    %162 = vmatprep.subr.mxu0 0.0
    %163 = vmatpush1.msra.mxu0 %v132
    %164 = vmatprep.subr.mxu0 0.0
    %165 = vmatpush1.msra.mxu0 %v133
    %166 = vmatprep.subr.mxu0 0.0
    %167 = vmatpush1.msra.mxu0 0.0
    %168 = vmatprep.subr.mxu0 0.0
    %169 = vmatpush1.msra.mxu0 0.0
    %170 = vmatprep.subr.mxu0 0.0
    %171 = vmatpush1.msra.mxu0 0.0
    %172 = vmatprep.subr.mxu0 0.0
    %173 = vmatpush1.msra.mxu0 0.0
    %174 = vmatprep.subr.mxu0 0.0
    %175 = vmatpush1.msra.mxu0 0.0
    %176 = vmatprep.subr.mxu0 0.0
    %177 = vmatpush1.msra.mxu0 0.0
    %178 = vmatprep.subr.mxu0 0.0
    %179 = vmatpush1.msra.mxu0 0.0
    %180 = vmatprep.subr.mxu0 0.0
    %181 = vmatpush1.msra.mxu0 0.0
    %182 = vmatprep.subr.mxu0 0.0
    %183 = vmatpush1.msra.mxu0 0.0
    %184 = vmatprep.subr.mxu0 0.0
    %185 = vmatpush1.msra.mxu0 0.0
    %186 = vmatprep.subr.mxu0 0.0
    %187 = vmatpush1.msra.mxu0 0.0
    %188 = vmatprep.subr.mxu0 0.0
    %189 = vmatpush1.msra.mxu0 0.0
    %190 = vmatprep.subr.mxu0 0.0
    %191 = vmatpush1.msra.mxu0 0.0
    %192 = vmatprep.subr.mxu0 0.0
    %193 = vmatpush1.msra.mxu0 0.0
    %194 = vmatprep.subr.mxu0 0.0
    %195 = vmatpush1.msra.mxu0 0.0
    %196 = vmatprep.subr.mxu0 0.0
    %197 = vmatpush1.msra.mxu0 0.0
    %198 = vmatprep.mubr.f32.mxu0 0.0
    %199 = vmatmul.mubr.f32.gmra.mrb[0].mxu0 %v115
    %v200 = vpop.f32.mrb[0].mxu0
    %v201 = vadd.f32 0.0, %v200
    %v202 = vpop.f32.mrb[0].mxu0
    %203 = vdwg.mxu0
    %204 = vst.msk [vmem:[#allocation4] sm:$0xff] %vm33, %v201
    // Predicated region
    $region18: #{tpu_custom_call.1} parent=1 // pred_check
      _
    $region19: #{tpu_custom_call.1} parent=1 // pred_check_branch
      %206 = sbr.rel (0) target = $region21
    $region20: #{tpu_custom_call.1} parent=1 // pred_region
      %s208 = ssub.s32 128, 128
      %209 = vsyncadd [#allocation3], %s208
      %s211 = sshll.u32 [#allocation2], 4
      %s212 = int_to_ptr.vmem [resolvable:$true] %s211
      %214 = dma.vmem_to_hbm [thread:$0]  %s212, 128, %s4, [#allocation3]
    $region21: #{tpu_custom_call.1} parent=1 // pred_fallthru
      _
    // Predicated region
    $region22: #{tpu_custom_call.1} parent=1 // pred_check
      _
    $region23: #{tpu_custom_call.1} parent=1 // pred_check_branch
      %216 = sbr.rel (0) target = $region25
    $region24: #{tpu_custom_call.1} parent=1 // pred_region
      %s218 = ssub.s32 128, 128
      %219 = vsyncadd [#allocation5], %s218
      %s221 = sshll.u32 [#allocation4], 4
      %s222 = int_to_ptr.vmem [resolvable:$true] %s221
      %224 = dma.vmem_to_hbm [thread:$0]  %s222, 128, %s5, [#allocation5]
    $region25: #{tpu_custom_call.1} parent=1 // pred_fallthru
      _
    // Predicated region
    $region26: #{tpu_custom_call.1} parent=1 // pred_check
      _
    $region27: #{tpu_custom_call.1} parent=1 // pred_check_branch
      %226 = sbr.rel (0) target = $region29
    $region28: #{tpu_custom_call.1} parent=1 // pred_region
      %227 = dma.done [#allocation3], 128
    $region29: #{tpu_custom_call.1} parent=1 // pred_fallthru
      _
    // Predicated region
    $region30: #{tpu_custom_call.1} parent=1 // pred_check
      _
    $region31: #{tpu_custom_call.1} parent=1 // pred_check_branch
      %229 = sbr.rel (0) target = $region33
    $region32: #{tpu_custom_call.1} parent=1 // pred_region
      %230 = dma.done [#allocation5], 128
    $region33: #{tpu_custom_call.1} parent=1 // pred_fallthru
      _
    %231 = vsyncpa [#allocation3], 1
    %232 = vsyncpa [#allocation5], 1

</llo_original>
